<compile_context>
chip_gen: v5e
topology: v5e:2x2
jax: 0.10.0
libtpu: 0.0.40
codegen_flags: <defaults>
</compile_context>

<pallas_src>
import jax
import jax.numpy as jnp
from jax.experimental import pallas as pl
from jax.experimental.pallas import tpu as pltpu


def attention_gate_kernel(x_ref, g_ref, wx_ref, bx_ref, wg_ref, bg_ref,
                          wp_ref, bp_ref, out_ref):
    x = x_ref[0]          # (Cin, T)   spatial on the lane axis
    g = g_ref[0]          # (Cg,  T)

    # 1x1 convs as channels-first matmuls: (Cout, Cin) @ (Cin, T) -> (Cout, T)
    xw = jnp.dot(wx_ref[...], x,
                 preferred_element_type=jnp.float32) + bx_ref[...]
    gw = jnp.dot(wg_ref[...], g,
                 preferred_element_type=jnp.float32) + bg_ref[...]

    a = jnp.maximum(xw + gw, 0.0)                        # relu(g + x)

    # psi: project inter_channels -> 1 channel, then sigmoid
    p = jnp.dot(wp_ref[...], a,
                preferred_element_type=jnp.float32) + bp_ref[...]   # (1, T)
    attn = jax.nn.sigmoid(p)                              # broadcasts over Cint

    out_ref[0] = (xw * attn).astype(out_ref.dtype)        # lane-dense store


def _pick_spatial_tile(hw, max_tile=4096):
    """Largest tile (<= max_tile) that evenly divides H*W; full extent if small."""
    if hw <= max_tile:
        return hw
    if hw % 128 != 0:
        return hw                     # fall back to a single full-extent block
    t = max_tile
    while hw % t != 0:
        t //= 2
    return max(t, 128)


def attention_gate(x, g, wx, bx, wg, bg, wp, bp, *, spatial_tile=None):
    """x: (B, Cin, H, W), g: (B, Cg, H, W) — NCHW like PyTorch.

    wx: (Cint, Cin), wg: (Cint, Cg), wp: (1, Cint)  (PyTorch conv weight, squeezed)
    bx, bg: (Cint, 1), bp: (1, 1)
    """
    B, Cin, H, W = x.shape
    _, Cg, _, _ = g.shape
    Cint = wx.shape[0]
    HW = H * W

    if spatial_tile is None:
        spatial_tile = _pick_spatial_tile(HW)
    assert HW % spatial_tile == 0

    # Free reshapes (NCHW is contiguous as (B, C, H*W)) — no transpose passes.
    x3 = x.reshape(B, Cin, HW)
    g3 = g.reshape(B, Cg, HW)

    grid = (B, HW // spatial_tile)

    def row_spec(c):
        return pl.BlockSpec((1, c, spatial_tile), lambda b, j: (b, 0, j))

    def full_spec(a):
        return pl.BlockSpec(a.shape, lambda b, j: (0, 0))

    out3 = pl.pallas_call(
        attention_gate_kernel,
        out_shape=jax.ShapeDtypeStruct((B, Cint, HW), x.dtype),
        grid_spec=pltpu.PrefetchScalarGridSpec(
            num_scalar_prefetch=0,
            grid=grid,
            in_specs=[
                row_spec(Cin),                    # x block  (1, Cin, T)
                row_spec(Cg),                     # g block  (1, Cg,  T)
                full_spec(wx), full_spec(bx),     # W_x, b_x
                full_spec(wg), full_spec(bg),     # W_g, b_g
                full_spec(wp), full_spec(bp),     # psi
            ],
            out_specs=pl.BlockSpec((1, Cint, spatial_tile),
                                   lambda b, j: (b, 0, j)),
        ),
        compiler_params=pltpu.CompilerParams(
            dimension_semantics=("parallel", "parallel"),
            vmem_limit_bytes=48 * 1024 * 1024,
        ),
    )(x3, g3, wx, bx, wg, bg, wp, bp)

    return out3.reshape(B, Cint, H, W)


def _init_conv_params(key, c_in, c_out):
    """Deterministic Conv2d-style (kernel_size=1) param init, channels-first."""
    kw, kb = jax.random.split(key)
    bound = 1.0 / jnp.sqrt(c_in)
    w = jax.random.uniform(kw, (c_out, c_in), jnp.float32, -bound, bound)
    b = jax.random.uniform(kb, (c_out, 1), jnp.float32, -bound, bound)
    return w, b


def _reference(x, g, wx, bx, wg, bg, wp, bp):
    """Pure-JAX reference matching the PyTorch forward (NCHW)."""
    def conv1x1(inp, w, b):
        out = jnp.einsum('oc,bchw->bohw', w, inp)
        return out + b[:, 0][None, :, None, None]

    xw = conv1x1(x, wx, bx)
    gw = conv1x1(g, wg, bg)
    attn = jax.nn.sigmoid(conv1x1(jnp.maximum(gw + xw, 0.0), wp, bp))
    return xw * attn


if __name__ == "__main__":
    key = jax.random.PRNGKey(0)
    k_x, k_g, k_wx, k_wg, k_wp = jax.random.split(key, 5)

    B, H, W = 2, 16, 16
    in_channels, gating_channels, inter_channels = 4, 4, 8

    x = jax.random.normal(k_x, (B, in_channels, H, W), jnp.float32)
    g = jax.random.normal(k_g, (B, gating_channels, H, W), jnp.float32)

    wx, bx = _init_conv_params(k_wx, in_channels, inter_channels)      # W_x
    wg, bg = _init_conv_params(k_wg, gating_channels, inter_channels)  # W_g
    wp, bp = _init_conv_params(k_wp, inter_channels, 1)                # psi

    out = attention_gate(x, g, wx, bx, wg, bg, wp, bp)
    out = jax.block_until_ready(out)

    ref = _reference(x, g, wx, bx, wg, bg, wp, bp)
    assert out.shape == (B, inter_channels, H, W)
    assert jnp.allclose(out, ref, atol=1e-5, rtol=1e-5), "mismatch vs reference"

    print("KERNEL_OK")
</pallas_src>

<mosaic_0001>
module attributes {stable_mosaic.version = 11 : i64} {
  func.func @attention_gate_kernel(%arg0: i32, %arg1: i32, %arg2: memref<1x4x256xf32, #tpu.memory_space<vmem>>, %arg3: memref<1x4x256xf32, #tpu.memory_space<vmem>>, %arg4: memref<8x4xf32, #tpu.memory_space<vmem>>, %arg5: memref<8x1xf32, #tpu.memory_space<vmem>>, %arg6: memref<8x4xf32, #tpu.memory_space<vmem>>, %arg7: memref<8x1xf32, #tpu.memory_space<vmem>>, %arg8: memref<1x8xf32, #tpu.memory_space<vmem>>, %arg9: memref<1x1xf32, #tpu.memory_space<vmem>>, %arg10: memref<1x8x256xf32, #tpu.memory_space<vmem>>) attributes {dimension_semantics = [#tpu.dimension_semantics<parallel>, #tpu.dimension_semantics<parallel>], iteration_bounds = array<i64: 2, 1>, scalar_prefetch = 0 : i64, scratch_operands = 0 : i64, tpu.core_type = #tpu.core_type<tc>, window_params = [{transform_indices = @transform_0, window_bounds = array<i64: 1, 4, 256>}, {transform_indices = @transform_1, window_bounds = array<i64: 1, 4, 256>}, {pipeline_mode = #tpu.pipeline_mode<synchronous>, transform_indices = @transform_2, window_bounds = array<i64: 8, 4>}, {pipeline_mode = #tpu.pipeline_mode<synchronous>, transform_indices = @transform_3, window_bounds = array<i64: 8, 1>}, {pipeline_mode = #tpu.pipeline_mode<synchronous>, transform_indices = @transform_4, window_bounds = array<i64: 8, 4>}, {pipeline_mode = #tpu.pipeline_mode<synchronous>, transform_indices = @transform_5, window_bounds = array<i64: 8, 1>}, {pipeline_mode = #tpu.pipeline_mode<synchronous>, transform_indices = @transform_6, window_bounds = array<i64: 1, 8>}, {pipeline_mode = #tpu.pipeline_mode<synchronous>, transform_indices = @transform_7, window_bounds = array<i64: 1, 1>}, {transform_indices = @transform_8, window_bounds = array<i64: 1, 8, 256>}]} {
    %c0 = arith.constant 0 : index
    %c0_0 = arith.constant 0 : index
    %c0_1 = arith.constant 0 : index
    %0 = vector.load %arg2[%c0, %c0_0, %c0_1] : memref<1x4x256xf32, #tpu.memory_space<vmem>>, vector<1x4x256xf32>
    %1 = vector.shape_cast %0 : vector<1x4x256xf32> to vector<4x256xf32>
    %c0_2 = arith.constant 0 : index
    %c0_3 = arith.constant 0 : index
    %c0_4 = arith.constant 0 : index
    %2 = vector.load %arg3[%c0_2, %c0_3, %c0_4] : memref<1x4x256xf32, #tpu.memory_space<vmem>>, vector<1x4x256xf32>
    %3 = vector.shape_cast %2 : vector<1x4x256xf32> to vector<4x256xf32>
    %c0_5 = arith.constant 0 : index
    %c0_6 = arith.constant 0 : index
    %4 = vector.load %arg4[%c0_5, %c0_6] : memref<8x4xf32, #tpu.memory_space<vmem>>, vector<8x4xf32>
    %cst = arith.constant dense<0.000000e+00> : vector<8x256xf32>
    %5 = tpu.matmul %4, %1, %cst {dimension_numbers = #tpu.dot_dimension_numbers<[1], [0], [0], [1], [0, 0, 1, 1], [], []>} : vector<8x4xf32>, vector<4x256xf32>, vector<8x256xf32> -> vector<8x256xf32>
    %c0_7 = arith.constant 0 : index
    %c0_8 = arith.constant 0 : index
    %6 = vector.load %arg5[%c0_7, %c0_8] : memref<8x1xf32, #tpu.memory_space<vmem>>, vector<8x1xf32>
    %7 = vector.broadcast %6 : vector<8x1xf32> to vector<8x256xf32>
    %8 = arith.addf %5, %7 : vector<8x256xf32>
    %c0_9 = arith.constant 0 : index
    %c0_10 = arith.constant 0 : index
    %9 = vector.load %arg6[%c0_9, %c0_10] : memref<8x4xf32, #tpu.memory_space<vmem>>, vector<8x4xf32>
    %cst_11 = arith.constant dense<0.000000e+00> : vector<8x256xf32>
    %10 = tpu.matmul %9, %3, %cst_11 {dimension_numbers = #tpu.dot_dimension_numbers<[1], [0], [0], [1], [0, 0, 1, 1], [], []>} : vector<8x4xf32>, vector<4x256xf32>, vector<8x256xf32> -> vector<8x256xf32>
    %c0_12 = arith.constant 0 : index
    %c0_13 = arith.constant 0 : index
    %11 = vector.load %arg7[%c0_12, %c0_13] : memref<8x1xf32, #tpu.memory_space<vmem>>, vector<8x1xf32>
    %12 = vector.broadcast %11 : vector<8x1xf32> to vector<8x256xf32>
    %13 = arith.addf %10, %12 : vector<8x256xf32>
    %14 = arith.addf %8, %13 : vector<8x256xf32>
    %cst_14 = arith.constant 0.000000e+00 : f32
    %15 = vector.broadcast %cst_14 : f32 to vector<8x256xf32>
    %16 = arith.maximumf %14, %15 : vector<8x256xf32>
    %c0_15 = arith.constant 0 : index
    %c0_16 = arith.constant 0 : index
    %17 = vector.load %arg8[%c0_15, %c0_16] : memref<1x8xf32, #tpu.memory_space<vmem>>, vector<1x8xf32>
    %cst_17 = arith.constant dense<0.000000e+00> : vector<1x256xf32>
    %18 = tpu.matmul %17, %16, %cst_17 {dimension_numbers = #tpu.dot_dimension_numbers<[1], [0], [0], [1], [0, 0, 1, 1], [], []>} : vector<1x8xf32>, vector<8x256xf32>, vector<1x256xf32> -> vector<1x256xf32>
    %c0_18 = arith.constant 0 : index
    %c0_19 = arith.constant 0 : index
    %19 = vector.load %arg9[%c0_18, %c0_19] : memref<1x1xf32, #tpu.memory_space<vmem>>, vector<1x1xf32>
    %20 = vector.broadcast %19 : vector<1x1xf32> to vector<1x256xf32>
    %21 = arith.addf %18, %20 : vector<1x256xf32>
    %22 = arith.negf %21 : vector<1x256xf32>
    %23 = math.exp %22 : vector<1x256xf32>
    %cst_20 = arith.constant 1.000000e+00 : f32
    %24 = vector.broadcast %cst_20 : f32 to vector<1x256xf32>
    %25 = arith.addf %24, %23 : vector<1x256xf32>
    %26 = arith.divf %24, %25 : vector<1x256xf32>
    %27 = vector.broadcast %26 : vector<1x256xf32> to vector<8x256xf32>
    %28 = arith.mulf %8, %27 : vector<8x256xf32>
    %c0_21 = arith.constant 0 : index
    %c0_22 = arith.constant 0 : index
    %c0_23 = arith.constant 0 : index
    %29 = vector.load %arg10[%c0_21, %c0_22, %c0_23] : memref<1x8x256xf32, #tpu.memory_space<vmem>>, vector<1x8x256xf32>
    %30 = vector.shape_cast %29 : vector<1x8x256xf32> to vector<8x256xf32>
    %31 = vector.shape_cast %28 : vector<8x256xf32> to vector<1x8x256xf32>
    tpu.vector_store %arg10[%c0_21, %c0_22, %c0_23], %31 {strides = array<i32>} : memref<1x8x256xf32, #tpu.memory_space<vmem>>, vector<1x8x256xf32>,
    return
  }
  func.func @transform_0(%arg0: i32, %arg1: i32) -> (i32, i32, i32) {
    %c0_i32 = arith.constant 0 : i32
    %c0_i32_0 = arith.constant 0 : i32
    return %arg0, %c0_i32, %arg1 : i32, i32, i32
  }
  func.func @transform_1(%arg0: i32, %arg1: i32) -> (i32, i32, i32) {
    %c0_i32 = arith.constant 0 : i32
    %c0_i32_0 = arith.constant 0 : i32
    return %arg0, %c0_i32, %arg1 : i32, i32, i32
  }
  func.func @transform_2(%arg0: i32, %arg1: i32) -> (i32, i32) {
    %c0_i32 = arith.constant 0 : i32
    %c0_i32_0 = arith.constant 0 : i32
    %c0_i32_1 = arith.constant 0 : i32
    return %c0_i32, %c0_i32_0 : i32, i32
  }
  func.func @transform_3(%arg0: i32, %arg1: i32) -> (i32, i32) {
    %c0_i32 = arith.constant 0 : i32
    %c0_i32_0 = arith.constant 0 : i32
    %c0_i32_1 = arith.constant 0 : i32
    return %c0_i32, %c0_i32_0 : i32, i32
  }
  func.func @transform_4(%arg0: i32, %arg1: i32) -> (i32, i32) {
    %c0_i32 = arith.constant 0 : i32
    %c0_i32_0 = arith.constant 0 : i32
    %c0_i32_1 = arith.constant 0 : i32
    return %c0_i32, %c0_i32_0 : i32, i32
  }
  func.func @transform_5(%arg0: i32, %arg1: i32) -> (i32, i32) {
    %c0_i32 = arith.constant 0 : i32
    %c0_i32_0 = arith.constant 0 : i32
    %c0_i32_1 = arith.constant 0 : i32
    return %c0_i32, %c0_i32_0 : i32, i32
  }
  func.func @transform_6(%arg0: i32, %arg1: i32) -> (i32, i32) {
    %c0_i32 = arith.constant 0 : i32
    %c0_i32_0 = arith.constant 0 : i32
    %c0_i32_1 = arith.constant 0 : i32
    return %c0_i32, %c0_i32_0 : i32, i32
  }
  func.func @transform_7(%arg0: i32, %arg1: i32) -> (i32, i32) {
    %c0_i32 = arith.constant 0 : i32
    %c0_i32_0 = arith.constant 0 : i32
    %c0_i32_1 = arith.constant 0 : i32
    return %c0_i32, %c0_i32_0 : i32, i32
  }
  func.func @transform_8(%arg0: i32, %arg1: i32) -> (i32, i32, i32) {
    %c0_i32 = arith.constant 0 : i32
    %c0_i32_0 = arith.constant 0 : i32
    return %arg0, %c0_i32, %arg1 : i32, i32, i32
  }
}

</mosaic_0001>

<llo_original>
// kernel: tpu_custom_call.1
$region0: #{tpu_custom_call.1}
  #allocation0 [shape = 'u32[]', space=smem, size = 0x4, offset = 0x4, fixed_abs, tag = 'smem constant byte address 0x4 - core index']
  #allocation1 [shape = 'u32[72,128]{1,0:T(1,128)}', space=vmem, size = 0x9000, scoped, tag = 'internal scratch']
  #allocation2 [shape = 'f32[1,1]{1,0:T(1,128)S(1)}', space=vmem, size = 0x200, scoped, tag = 'scoped memory for tpu_custom_call.1']
  %s0 = inlined_call_operand.vmem [shape: f32[2,4,256], index: 0, kind: input, shape index: {}]
  %s1 = inlined_call_operand.hbm [shape: f32[2,4,256], index: 1, kind: input, shape index: {}]
  %s2 = inlined_call_operand.vmem [shape: f32[8,4], index: 2, kind: input, shape index: {}]
  %s3 = inlined_call_operand.vmem [shape: f32[8,1], index: 3, kind: input, shape index: {}]
  %s4 = inlined_call_operand.vmem [shape: f32[8,4], index: 4, kind: input, shape index: {}]
  %s5 = inlined_call_operand.vmem [shape: f32[8,1], index: 5, kind: input, shape index: {}]
  %s6 = inlined_call_operand.vmem [shape: f32[1,8], index: 6, kind: input, shape index: {}]
  %s7 = inlined_call_operand.<no memory space> [shape: f32[1,1], index: 7, kind: input, shape index: {}]
  %s8 = inlined_call_operand.hbm [shape: f32[2,8,256], index: 8, kind: output, shape index: {}]
  %s9 = sld [smem:[#allocation0]]
  $region69: #{tpu_custom_call.1} parent=0
    _
  %s11 = ssub.s32 1, %s9
  %s12 = scalar_select 0, %s11, %s9
  %v13 = vstv %s7
  %14 = vst [vmem:[#allocation2] sm:$0x1] %v13
  $region1: #{tpu_custom_call.1} parent=0
    #allocation3 [shape = 'u8[8192]{0}', space=vmem, size = 0x2000, scoped, tag = 'input window, operand 1']
    #allocation4 [shape = 's32[2]{0}', space=sflag, size = 0x8, scoped, tag = 'scoped memory for tpu_custom_call.1']
    #allocation5 [shape = 's32[2]{0}', space=sflag, size = 0x8, scoped, tag = 'scoped memory for tpu_custom_call.1']
    #allocation6 [shape = 'u8[16384]{0}', space=vmem, size = 0x4000, scoped, tag = 'output window, operand 0']
    %15 = vsyncpa [#allocation4], 0
    %s16 = scalar_lea.sflag [#allocation4], 1
    %17 = vsyncpa %s16, 0
    %18 = vsyncpa [#allocation5], 0
    %s19 = scalar_lea.sflag [#allocation5], 1
    %20 = vsyncpa %s19, 0
    loop: start=0, step=1, limit=4
    $region2: #{tpu_custom_call.1} parent=1 // loop_pre_header
      _
    $region3: #{tpu_custom_call.1} parent=1 // loop_header
      %s22 = sphi 0, %s26
      %p23 = scmp.ge.s32.totalorder %s22, 4
      %s29 = sphi 0, %s41
      %s30 = sphi 0, %s37
      %s31 = sphi 0, %s29
      %s32 = sphi 0, %s30
      %s33 = sphi 0, %s31
      %s34 = sphi 0, %s32
      %s46 = sphi 0, %s48
      %s49 = sphi 0, %s46
      %s50 = sphi 0, %s49
      %s66 = sphi 0, %s50
      %s74 = sphi 0, %s76
      %s77 = sphi 0, %s74
      %s78 = sphi 0, %s77
      %s94 = sphi 0, %s78
      %s98 = sphi 0, %s98
      %s100 = sphi 0, %s98
      %s101 = sphi 0, %s100
      %s115 = sphi 0, %s101
      %s119 = sphi 0, %s119
      %s121 = sphi 0, %s119
      %s122 = sphi 0, %s121
      %s136 = sphi 0, %s122
      %s140 = sphi 0, %s140
      %s142 = sphi 0, %s140
      %s143 = sphi 0, %s142
      %s157 = sphi 0, %s143
      %s161 = sphi 0, %s161
      %s163 = sphi 0, %s161
      %s164 = sphi 0, %s163
      %s178 = sphi 0, %s164
      %s182 = sphi 0, %s182
      %s184 = sphi 0, %s182
      %s185 = sphi 0, %s184
      %s199 = sphi 0, %s185
      %s203 = sphi 0, %s203
      %s205 = sphi 0, %s203
      %s206 = sphi 0, %s205
      %s220 = sphi 0, %s206
      %s228 = sphi 0, %s230
      %s231 = sphi 0, %s228
      %s232 = sphi 0, %s231
      %s248 = sphi 0, %s232
    $region4: #{tpu_custom_call.1} parent=1 // loop_header_branch
      %25 = sbr.rel (%p23) target = $region8
    $region5: #{tpu_custom_call.1} parent=1 // loop_body
      %s27 = ssub.s32 %s22, 1
      %s28 = ssub.s32 %s22, 2
      %s35 = sadd.s32 1, %s30
      %p36 = scmp.ge.s32.totalorder %s35, 1
      %s37 = scalar_select %p36, 0, %s35
      %s38 = sadd.s32 1, %s29
      %s39 = scalar_select %p36, %s38, %s29
      %p40 = scmp.ge.s32.totalorder %s39, 2
      %s41 = scalar_select %p40, 0, %s39
      %s42 = ssub.s32 %s29, %s41
      %s43 = ssub.s32 %s30, %s37
      %s44 = sor.u32 %s42, %s43
      %p45 = scmp.eq.s32.totalorder %s44, 0
      %s47 = sadd.s32 %s46, 1
      %s48 = scalar_select %p45, %s46, %s47
      %p51 = pneg %p45
      %p52 = scmp.eq.s32.totalorder %s22, 1
      %p53 = por %p51, %p52
      %p54 = scmp.ne.s32.totalorder %s46, %s49
      %p55 = scmp.eq.s32.totalorder %s22, 0
      %p56 = por %p54, %p55
      %p57 = scmp.ne.s32.totalorder %s46, %s49
      %p58 = scmp.eq.s32.totalorder %s27, 1
      %p59 = por %p57, %p58
      %p60 = scmp.ne.s32.totalorder %s49, %s50
      %p61 = scmp.eq.s32.totalorder %s27, 0
      %p62 = por %p60, %p61
      %p63 = scmp.ne.s32.totalorder %s49, %s50
      %p64 = scmp.eq.s32.totalorder %s28, 1
      %p65 = por %p63, %p64
      %p67 = scmp.ne.s32.totalorder %s50, %s66
      %p68 = scmp.eq.s32.totalorder %s28, 0
      %p69 = por %p67, %p68
      %s70 = ssub.s32 %s29, %s41
      %s71 = ssub.s32 %s30, %s37
      %s72 = sor.u32 %s70, %s71
      %p73 = scmp.eq.s32.totalorder %s72, 0
      %s75 = sadd.s32 %s74, 1
      %s76 = scalar_select %p73, %s74, %s75
      %p79 = pneg %p73
      %p80 = scmp.eq.s32.totalorder %s22, 1
      %p81 = por %p79, %p80
      %p82 = scmp.ne.s32.totalorder %s74, %s77
      %p83 = scmp.eq.s32.totalorder %s22, 0
      %p84 = por %p82, %p83
      %p85 = scmp.ne.s32.totalorder %s74, %s77
      %p86 = scmp.eq.s32.totalorder %s27, 1
      %p87 = por %p85, %p86
      %p88 = scmp.ne.s32.totalorder %s77, %s78
      %p89 = scmp.eq.s32.totalorder %s27, 0
      %p90 = por %p88, %p89
      %p91 = scmp.ne.s32.totalorder %s77, %s78
      %p92 = scmp.eq.s32.totalorder %s28, 1
      %p93 = por %p91, %p92
      %p95 = scmp.ne.s32.totalorder %s78, %s94
      %p96 = scmp.eq.s32.totalorder %s28, 0
      %p97 = por %p95, %p96
      %s99 = sadd.s32 %s98, 1
      %p102 = scmp.eq.s32.totalorder %s22, 1
      %p103 = scmp.ne.s32.totalorder %s98, %s100
      %p104 = scmp.eq.s32.totalorder %s22, 0
      %p105 = por %p103, %p104
      %p106 = scmp.ne.s32.totalorder %s98, %s100
      %p107 = scmp.eq.s32.totalorder %s27, 1
      %p108 = por %p106, %p107
      %p109 = scmp.ne.s32.totalorder %s100, %s101
      %p110 = scmp.eq.s32.totalorder %s27, 0
      %p111 = por %p109, %p110
      %p112 = scmp.ne.s32.totalorder %s100, %s101
      %p113 = scmp.eq.s32.totalorder %s28, 1
      %p114 = por %p112, %p113
      %p116 = scmp.ne.s32.totalorder %s101, %s115
      %p117 = scmp.eq.s32.totalorder %s28, 0
      %p118 = por %p116, %p117
      %s120 = sadd.s32 %s119, 1
      %p123 = scmp.eq.s32.totalorder %s22, 1
      %p124 = scmp.ne.s32.totalorder %s119, %s121
      %p125 = scmp.eq.s32.totalorder %s22, 0
      %p126 = por %p124, %p125
      %p127 = scmp.ne.s32.totalorder %s119, %s121
      %p128 = scmp.eq.s32.totalorder %s27, 1
      %p129 = por %p127, %p128
      %p130 = scmp.ne.s32.totalorder %s121, %s122
      %p131 = scmp.eq.s32.totalorder %s27, 0
      %p132 = por %p130, %p131
      %p133 = scmp.ne.s32.totalorder %s121, %s122
      %p134 = scmp.eq.s32.totalorder %s28, 1
      %p135 = por %p133, %p134
      %p137 = scmp.ne.s32.totalorder %s122, %s136
      %p138 = scmp.eq.s32.totalorder %s28, 0
      %p139 = por %p137, %p138
      %s141 = sadd.s32 %s140, 1
      %p144 = scmp.eq.s32.totalorder %s22, 1
      %p145 = scmp.ne.s32.totalorder %s140, %s142
      %p146 = scmp.eq.s32.totalorder %s22, 0
      %p147 = por %p145, %p146
      %p148 = scmp.ne.s32.totalorder %s140, %s142
      %p149 = scmp.eq.s32.totalorder %s27, 1
      %p150 = por %p148, %p149
      %p151 = scmp.ne.s32.totalorder %s142, %s143
      %p152 = scmp.eq.s32.totalorder %s27, 0
      %p153 = por %p151, %p152
      %p154 = scmp.ne.s32.totalorder %s142, %s143
      %p155 = scmp.eq.s32.totalorder %s28, 1
      %p156 = por %p154, %p155
      %p158 = scmp.ne.s32.totalorder %s143, %s157
      %p159 = scmp.eq.s32.totalorder %s28, 0
      %p160 = por %p158, %p159
      %s162 = sadd.s32 %s161, 1
      %p165 = scmp.eq.s32.totalorder %s22, 1
      %p166 = scmp.ne.s32.totalorder %s161, %s163
      %p167 = scmp.eq.s32.totalorder %s22, 0
      %p168 = por %p166, %p167
      %p169 = scmp.ne.s32.totalorder %s161, %s163
      %p170 = scmp.eq.s32.totalorder %s27, 1
      %p171 = por %p169, %p170
      %p172 = scmp.ne.s32.totalorder %s163, %s164
      %p173 = scmp.eq.s32.totalorder %s27, 0
      %p174 = por %p172, %p173
      %p175 = scmp.ne.s32.totalorder %s163, %s164
      %p176 = scmp.eq.s32.totalorder %s28, 1
      %p177 = por %p175, %p176
      %p179 = scmp.ne.s32.totalorder %s164, %s178
      %p180 = scmp.eq.s32.totalorder %s28, 0
      %p181 = por %p179, %p180
      %s183 = sadd.s32 %s182, 1
      %p186 = scmp.eq.s32.totalorder %s22, 1
      %p187 = scmp.ne.s32.totalorder %s182, %s184
      %p188 = scmp.eq.s32.totalorder %s22, 0
      %p189 = por %p187, %p188
      %p190 = scmp.ne.s32.totalorder %s182, %s184
      %p191 = scmp.eq.s32.totalorder %s27, 1
      %p192 = por %p190, %p191
      %p193 = scmp.ne.s32.totalorder %s184, %s185
      %p194 = scmp.eq.s32.totalorder %s27, 0
      %p195 = por %p193, %p194
      %p196 = scmp.ne.s32.totalorder %s184, %s185
      %p197 = scmp.eq.s32.totalorder %s28, 1
      %p198 = por %p196, %p197
      %p200 = scmp.ne.s32.totalorder %s185, %s199
      %p201 = scmp.eq.s32.totalorder %s28, 0
      %p202 = por %p200, %p201
      %s204 = sadd.s32 %s203, 1
      %p207 = scmp.eq.s32.totalorder %s22, 1
      %p208 = scmp.ne.s32.totalorder %s203, %s205
      %p209 = scmp.eq.s32.totalorder %s22, 0
      %p210 = por %p208, %p209
      %p211 = scmp.ne.s32.totalorder %s203, %s205
      %p212 = scmp.eq.s32.totalorder %s27, 1
      %p213 = por %p211, %p212
      %p214 = scmp.ne.s32.totalorder %s205, %s206
      %p215 = scmp.eq.s32.totalorder %s27, 0
      %p216 = por %p214, %p215
      %p217 = scmp.ne.s32.totalorder %s205, %s206
      %p218 = scmp.eq.s32.totalorder %s28, 1
      %p219 = por %p217, %p218
      %p221 = scmp.ne.s32.totalorder %s206, %s220
      %p222 = scmp.eq.s32.totalorder %s28, 0
      %p223 = por %p221, %p222
      %s224 = ssub.s32 %s29, %s41
      %s225 = ssub.s32 %s30, %s37
      %s226 = sor.u32 %s224, %s225
      %p227 = scmp.eq.s32.totalorder %s226, 0
      %s229 = sadd.s32 %s228, 1
      %s230 = scalar_select %p227, %s228, %s229
      %p233 = pneg %p227
      %p234 = scmp.eq.s32.totalorder %s22, 1
      %p235 = por %p233, %p234
      %p236 = scmp.ne.s32.totalorder %s228, %s231
      %p237 = scmp.eq.s32.totalorder %s22, 0
      %p238 = por %p236, %p237
      %p239 = scmp.ne.s32.totalorder %s228, %s231
      %p240 = scmp.eq.s32.totalorder %s27, 1
      %p241 = por %p239, %p240
      %p242 = scmp.ne.s32.totalorder %s231, %s232
      %p243 = scmp.eq.s32.totalorder %s27, 0
      %p244 = por %p242, %p243
      %p245 = scmp.ne.s32.totalorder %s231, %s232
      %p246 = scmp.eq.s32.totalorder %s28, 1
      %p247 = por %p245, %p246
      %p249 = scmp.ne.s32.totalorder %s232, %s248
      %p250 = scmp.eq.s32.totalorder %s28, 0
      %p251 = por %p249, %p250
      %p252 = scmp.le.s32.totalorder 1, %s22
      %p253 = scmp.lt.s32.totalorder %s22, 3
      %p254 = pnand %p252, %p253
      %p255 = pneg %p254
      // Predicated region
      $region9: #{tpu_custom_call.1} parent=5 // pred_check
        _
      $region10: #{tpu_custom_call.1} parent=5 // pred_check_branch
        %257 = sbr.rel (%p254) target = $region12
      $region11: #{tpu_custom_call.1} parent=5 // pred_region
        %s258 = ssub.s32 %s22, 1
        // Predicated region
        $region13: #{tpu_custom_call.1} parent=11 // pred_check
          %p259 = pneg %p111
        $region14: #{tpu_custom_call.1} parent=11 // pred_check_branch
          %261 = sbr.rel (%p259) target = $region16
        $region15: #{tpu_custom_call.1} parent=11 // pred_region
          _
        $region16: #{tpu_custom_call.1} parent=11 // pred_fallthru
          _
        // Predicated region
        $region17: #{tpu_custom_call.1} parent=11 // pred_check
          %p262 = pneg %p132
        $region18: #{tpu_custom_call.1} parent=11 // pred_check_branch
          %264 = sbr.rel (%p262) target = $region20
        $region19: #{tpu_custom_call.1} parent=11 // pred_region
          _
        $region20: #{tpu_custom_call.1} parent=11 // pred_fallthru
          _
        // Predicated region
        $region21: #{tpu_custom_call.1} parent=11 // pred_check
          %p265 = pneg %p153
        $region22: #{tpu_custom_call.1} parent=11 // pred_check_branch
          %267 = sbr.rel (%p265) target = $region24
        $region23: #{tpu_custom_call.1} parent=11 // pred_region
          _
        $region24: #{tpu_custom_call.1} parent=11 // pred_fallthru
          _
        // Predicated region
        $region25: #{tpu_custom_call.1} parent=11 // pred_check
          %p268 = pneg %p174
        $region26: #{tpu_custom_call.1} parent=11 // pred_check_branch
          %270 = sbr.rel (%p268) target = $region28
        $region27: #{tpu_custom_call.1} parent=11 // pred_region
          _
        $region28: #{tpu_custom_call.1} parent=11 // pred_fallthru
          _
        // Predicated region
        $region29: #{tpu_custom_call.1} parent=11 // pred_check
          %p271 = pneg %p195
        $region30: #{tpu_custom_call.1} parent=11 // pred_check_branch
          %273 = sbr.rel (%p271) target = $region32
        $region31: #{tpu_custom_call.1} parent=11 // pred_region
          _
        $region32: #{tpu_custom_call.1} parent=11 // pred_fallthru
          _
        // Predicated region
        $region33: #{tpu_custom_call.1} parent=11 // pred_check
          %p274 = pneg %p216
        $region34: #{tpu_custom_call.1} parent=11 // pred_check_branch
          %276 = sbr.rel (%p274) target = $region36
        $region35: #{tpu_custom_call.1} parent=11 // pred_region
          _
        $region36: #{tpu_custom_call.1} parent=11 // pred_fallthru
          _
      $region12: #{tpu_custom_call.1} parent=5 // pred_fallthru
        _
      %p277 = scmp.lt.s32.totalorder %s22, 2
      // Predicated region
      $region37: #{tpu_custom_call.1} parent=5 // pred_check
        %p278 = pneg %p277
      $region38: #{tpu_custom_call.1} parent=5 // pred_check_branch
        %280 = sbr.rel (%p278) target = $region40
      $region39: #{tpu_custom_call.1} parent=5 // pred_region
        // Predicated region
        $region41: #{tpu_custom_call.1} parent=39 // pred_check
          %p281 = pneg %p56
        $region42: #{tpu_custom_call.1} parent=39 // pred_check_branch
          %283 = sbr.rel (%p281) target = $region44
        $region43: #{tpu_custom_call.1} parent=39 // pred_region
          %s284 = smul.u32 2, %s30
          %p285 = scmp.lt.s32.totalorder %s29, 1
          %s286 = scalar_select %p285, %s29, 1
          %p287 = scmp.lt.s32.totalorder %s284, 1
          %s288 = scalar_select %p287, %s284, 1
          %s289 = smul.addr %s286, 2
          %s290 = sadd.s32 %s288, %s289
          %s291 = smul.addr %s290, 4
          %s292 = scalar_lea.vmem %s0, %s291
          %s293 = smul.u32 2, %s30
        $region44: #{tpu_custom_call.1} parent=39 // pred_fallthru
          _
        // Predicated region
        $region45: #{tpu_custom_call.1} parent=39 // pred_check
          %p294 = pneg %p84
        $region46: #{tpu_custom_call.1} parent=39 // pred_check_branch
          %296 = sbr.rel (%p294) target = $region48
        $region47: #{tpu_custom_call.1} parent=39 // pred_region
          %s297 = sand.u32 %s74, 1
          %s298 = scalar_lea.sflag [#allocation4], %s297
          %s299 = sand.u32 %s74, 1
          %s300 = smul.addr %s299, 8
          %s301 = scalar_lea.vmem [#allocation3], %s300
          %s302 = smul.u32 2, %s30
          %304 = vsyncadd %s298, 0
          %s305 = smul.addr %s29, 2
          %s306 = sadd.s32 %s302, %s305
          %s307 = smul.addr %s306, 4
          %s308 = scalar_lea.hbm %s1, %s307
          %s310 = sshll.u32 %s308, 4
          %s311 = int_to_ptr.hbm [resolvable:$true] %s310
          %s312 = sshll.u32 %s301, 4
          %s313 = int_to_ptr.vmem [resolvable:$true] %s312
          %315 = dma.hbm_to_vmem [thread:$0]  %s311, 128, %s313, %s298
        $region48: #{tpu_custom_call.1} parent=39 // pred_fallthru
          _
      $region40: #{tpu_custom_call.1} parent=5 // pred_fallthru
        _
      %p316 = scmp.le.s32.totalorder 1, %s22
      %p317 = scmp.lt.s32.totalorder %s22, 3
      %p318 = pnand %p316, %p317
      %p319 = pneg %p318
      // Predicated region
      $region49: #{tpu_custom_call.1} parent=5 // pred_check
        _
      $region50: #{tpu_custom_call.1} parent=5 // pred_check_branch
        %321 = sbr.rel (%p318) target = $region52
      $region51: #{tpu_custom_call.1} parent=5 // pred_region
        %s322 = ssub.s32 %s22, 1
        %s323 = sand.u32 %s77, 1
        %s324 = scalar_lea.sflag [#allocation4], %s323
        %s325 = sand.u32 %s77, 1
        %s326 = smul.addr %s325, 8
        %s327 = scalar_lea.vmem [#allocation3], %s326
        // Predicated region
        $region53: #{tpu_custom_call.1} parent=51 // pred_check
          %p328 = pneg %p90
        $region54: #{tpu_custom_call.1} parent=51 // pred_check_branch
          %330 = sbr.rel (%p328) target = $region56
        $region55: #{tpu_custom_call.1} parent=51 // pred_region
          %332 = dma.done %s324, 128
        $region56: #{tpu_custom_call.1} parent=51 // pred_fallthru
          _
        %s333 = smul.u32 2, %s32
        %p334 = scmp.lt.s32.totalorder %s31, 1
        %s335 = scalar_select %p334, %s31, 1
        %p336 = scmp.lt.s32.totalorder %s333, 1
        %s337 = scalar_select %p336, %s333, 1
        %s338 = smul.addr %s335, 2
        %s339 = sadd.s32 %s337, %s338
        %s340 = smul.addr %s339, 4
        %s341 = scalar_lea.vmem %s0, %s340
        %p342 = pneg %p62
        %p343 = pneg %p59
        %s344 = sand.u32 %s77, 1
        %s345 = scalar_lea.sflag [#allocation4], %s344
        %s346 = sand.u32 %s77, 1
        %s347 = smul.addr %s346, 8
        %s348 = scalar_lea.vmem [#allocation3], %s347
        %p349 = pneg %p90
        %p350 = pneg %p87
        %p351 = pneg %p111
        %p352 = pneg %p108
        %p353 = pneg %p132
        %p354 = pneg %p129
        %p355 = pneg %p153
        %p356 = pneg %p150
        %p357 = pneg %p174
        %p358 = pneg %p171
        %p359 = pneg %p195
        %p360 = pneg %p192
        %p361 = pneg %p216
        %p362 = pneg %p213
        %p363 = pneg %p244
        %p364 = pneg %p241
        %s365 = sand.u32 %s231, 1
        %s366 = scalar_lea.sflag [#allocation5], %s365
        %s367 = sand.u32 %s231, 1
        %s368 = smul.addr %s367, 16
        %s369 = scalar_lea.vmem [#allocation6], %s368
        %s370 = smul.u32 2, %s32
        %p371 = scmp.lt.s32.totalorder %s31, 1
        %s372 = scalar_select %p371, %s31, 1
        %p373 = scmp.lt.s32.totalorder %s370, 1
        %s374 = scalar_select %p373, %s370, 1
        %s375 = smul.addr %s372, 2
        %s376 = sadd.s32 %s374, %s375
        %s377 = smul.addr %s376, 4
        %s378 = scalar_lea.vmem %s0, %s377
        %s379 = smul.u32 2, %s32
        %s380 = smul.u32 2, %s32
        %s381 = smul.u32 2, %s32
        %v382 = vld [vmem:[%s378] sm:$0xff]
        %v383 = vld [vmem:[%s327] sm:$0xff]
        %v384 = vld [vmem:[%s2] sm:$0xff]
        %v385 = vld [vmem:[%s3] sm:$0xff]
        %387 = vset.pattern.permute.xlu0 0
        %388 = vperm.xlu0 %387, %v385
        %v389 = vpop.permute.xlu0 %388
        %392 = vst [vmem:[#allocation1] ss:$2 sm:$0xff] %v382
        %v393 = vld.sshfl [vmem:[#allocation1] sm:$0xff pattern:$0x75316420]
        %v394 = vld.sshfl [vmem:[#allocation1 + $0x8] sm:$0xff pattern:$0x75316420]
        %vm395 = vcmask 31744
        %v397 = vsel %vm395, %v384, 0
        %vm399 = vcmask 1043456
        %v400 = vsel %vm399, %v393, 0
        %v402 = vsel %vm399, %v394, 0
        %404 = vmatpush.msra.mxu0 0.0
        %405 = vmatpush.msra.mxu0 0.0
        %406 = vmatpush.msra.mxu0 0.0
        %407 = vmatpush.msra.mxu0 0.0
        %408 = vmatpush.msra.mxu0 0.0
        %409 = vmatpush.msra.mxu0 0.0
        %410 = vmatpush.msra.mxu0 0.0
        %411 = vmatpush.msra.mxu0 0.0
        %412 = vmatpush.msra.mxu0 0.0
        %413 = vmatpush.msra.mxu0 0.0
        %414 = vmatpush.msra.mxu0 0.0
        %415 = vmatpush.msra.mxu0 0.0
        %416 = vmatpush.msra.mxu0 0.0
        %417 = vmatpush.msra.mxu0 0.0
        %418 = vmatpush.msra.mxu0 0.0
        %419 = vmatpush.msra.mxu0 %v400
        %420 = vmatmul.f32.gmra.mxu0 %v397
        %v421 = vpop.f32.mrf.mxu0
        %v422 = vadd.f32 %v389, %v421
        %423 = vdwg.mxu0
        %424 = vmatpush.msra.mxu0 0.0
        %425 = vmatpush.msra.mxu0 0.0
        %426 = vmatpush.msra.mxu0 0.0
        %427 = vmatpush.msra.mxu0 0.0
        %428 = vmatpush.msra.mxu0 0.0
        %429 = vmatpush.msra.mxu0 0.0
        %430 = vmatpush.msra.mxu0 0.0
        %431 = vmatpush.msra.mxu0 0.0
        %432 = vmatpush.msra.mxu0 0.0
        %433 = vmatpush.msra.mxu0 0.0
        %434 = vmatpush.msra.mxu0 0.0
        %435 = vmatpush.msra.mxu0 0.0
        %436 = vmatpush.msra.mxu0 0.0
        %437 = vmatpush.msra.mxu0 0.0
        %438 = vmatpush.msra.mxu0 0.0
        %439 = vmatpush.msra.mxu0 %v402
        %440 = vmatmul.f32.gmra.mxu0 %v397
        %v441 = vpop.f32.mrf.mxu0
        %v442 = vadd.f32 %v389, %v441
        %443 = vdwg.mxu0
        %v444 = vld [vmem:[%s4] sm:$0xff]
        %v445 = vld [vmem:[%s5] sm:$0xff]
        %447 = vset.pattern.permute.xlu0 0
        %448 = vperm.xlu0 %447, %v445
        %v449 = vpop.permute.xlu0 %448
        %452 = vst [vmem:[#allocation1] ss:$2 sm:$0xff] %v383
        %v453 = vld.sshfl [vmem:[#allocation1] sm:$0xff pattern:$0x75316420]
        %v454 = vld.sshfl [vmem:[#allocation1 + $0x8] sm:$0xff pattern:$0x75316420]
        %v456 = vsel %vm395, %v444, 0
        %v458 = vsel %vm399, %v453, 0
        %v460 = vsel %vm399, %v454, 0
        %462 = vmatpush.msra.mxu0 0.0
        %463 = vmatpush.msra.mxu0 0.0
        %464 = vmatpush.msra.mxu0 0.0
        %465 = vmatpush.msra.mxu0 0.0
        %466 = vmatpush.msra.mxu0 0.0
        %467 = vmatpush.msra.mxu0 0.0
        %468 = vmatpush.msra.mxu0 0.0
        %469 = vmatpush.msra.mxu0 0.0
        %470 = vmatpush.msra.mxu0 0.0
        %471 = vmatpush.msra.mxu0 0.0
        %472 = vmatpush.msra.mxu0 0.0
        %473 = vmatpush.msra.mxu0 0.0
        %474 = vmatpush.msra.mxu0 0.0
        %475 = vmatpush.msra.mxu0 0.0
        %476 = vmatpush.msra.mxu0 0.0
        %477 = vmatpush.msra.mxu0 %v458
        %478 = vmatmul.f32.gmra.mxu0 %v456
        %v479 = vpop.f32.mrf.mxu0
        %v480 = vadd.f32 %v449, %v479
        %481 = vdwg.mxu0
        %482 = vmatpush.msra.mxu0 0.0
        %483 = vmatpush.msra.mxu0 0.0
        %484 = vmatpush.msra.mxu0 0.0
        %485 = vmatpush.msra.mxu0 0.0
        %486 = vmatpush.msra.mxu0 0.0
        %487 = vmatpush.msra.mxu0 0.0
        %488 = vmatpush.msra.mxu0 0.0
        %489 = vmatpush.msra.mxu0 0.0
        %490 = vmatpush.msra.mxu0 0.0
        %491 = vmatpush.msra.mxu0 0.0
        %492 = vmatpush.msra.mxu0 0.0
        %493 = vmatpush.msra.mxu0 0.0
        %494 = vmatpush.msra.mxu0 0.0
        %495 = vmatpush.msra.mxu0 0.0
        %496 = vmatpush.msra.mxu0 0.0
        %497 = vmatpush.msra.mxu0 %v460
        %498 = vmatmul.f32.gmra.mxu0 %v456
        %v499 = vpop.f32.mrf.mxu0
        %v500 = vadd.f32 %v449, %v499
        %501 = vdwg.mxu0
        %v502 = vadd.f32 %v422, %v480
        %v503 = vadd.f32 %v442, %v500
        %v504 = vmax.f32 %v502, 0.0
        %v505 = vmax.f32 %v503, 0.0
        %v506 = vld [vmem:[%s6] sm:$0x1]
        %v507 = vld [vmem:[#allocation2] sm:$0x1]
        %509 = vset.pattern.permute.xlu0 0
        %510 = vperm.xlu0 %509, %v507
        %v511 = vpop.permute.xlu0 %510
        %v513 = vperm.slane %v511, 0
        %vm514 = vcmask 64512
        %v516 = vsel %vm514, %v506, 0
        %518 = vmatpush.msra.mxu0 0.0
        %519 = vmatpush.msra.mxu0 0.0
        %520 = vmatpush.msra.mxu0 0.0
        %521 = vmatpush.msra.mxu0 0.0
        %522 = vmatpush.msra.mxu0 0.0
        %523 = vmatpush.msra.mxu0 0.0
        %524 = vmatpush.msra.mxu0 0.0
        %525 = vmatpush.msra.mxu0 0.0
        %526 = vmatpush.msra.mxu0 0.0
        %527 = vmatpush.msra.mxu0 0.0
        %528 = vmatpush.msra.mxu0 0.0
        %529 = vmatpush.msra.mxu0 0.0
        %530 = vmatpush.msra.mxu0 0.0
        %531 = vmatpush.msra.mxu0 0.0
        %532 = vmatpush.msra.mxu0 0.0
        %533 = vmatpush.msra.mxu0 %v504
        %534 = vmatmul.f32.gmra.mxu0 %v516
        %v535 = vpop.f32.mrf.mxu0
        %v536 = vadd.f32 %v513, %v535
        %537 = vdwg.mxu0
        %538 = vmatpush.msra.mxu0 0.0
        %539 = vmatpush.msra.mxu0 0.0
        %540 = vmatpush.msra.mxu0 0.0
        %541 = vmatpush.msra.mxu0 0.0
        %542 = vmatpush.msra.mxu0 0.0
        %543 = vmatpush.msra.mxu0 0.0
        %544 = vmatpush.msra.mxu0 0.0
        %545 = vmatpush.msra.mxu0 0.0
        %546 = vmatpush.msra.mxu0 0.0
        %547 = vmatpush.msra.mxu0 0.0
        %548 = vmatpush.msra.mxu0 0.0
        %549 = vmatpush.msra.mxu0 0.0
        %550 = vmatpush.msra.mxu0 0.0
        %551 = vmatpush.msra.mxu0 0.0
        %552 = vmatpush.msra.mxu0 0.0
        %553 = vmatpush.msra.mxu0 %v505
        %554 = vmatmul.f32.gmra.mxu0 %v516
        %v555 = vpop.f32.mrf.mxu0
        %v556 = vadd.f32 %v513, %v555
        %557 = vdwg.mxu0
        %v558 = vxor.u32 %v536, 2147483648
        %v559 = vxor.u32 %v556, 2147483648
        %v560 = vmul.f32 %v558, 1.442695
        %v561 = vpow.pop %v560
        %v562 = vmul.f32 %v559, 1.442695
        %v563 = vpow.pop %v562
        %v564 = vadd.f32 %v561, 1.0
        %v565 = vadd.f32 %v563, 1.0
        %v566 = vrcp.pop %v564
        %v567 = vmul.f32 %v564, %v566
        %v568 = vsub.f32 1.0, %v567
        %v569 = vmul.f32 %v566, %v568
        %v570 = vadd.f32 %v566, %v569
        %vm571 = vweird.f32 %v564
        %vm572 = vweird.f32 %v566
        %vm573 = vmor %vm571, %vm572
        %v574 = vsel %vm573, %v566, %v570
        %v575 = vand.u32 2147483647, %v564
        %vm576 = vcmp.eq.f32.partialorder %v575, 8.507059e+37
        %v577 = vand.u32 %v564, 2147483648
        %v578 = vor.u32 1.1754944e-38, %v577
        %v579 = vsel %vm576, %v578, %v574
        %v580 = vmul.f32 1.0, %v579
        %v581 = vrcp.pop %v565
        %v582 = vmul.f32 %v565, %v581
        %v583 = vsub.f32 1.0, %v582
        %v584 = vmul.f32 %v581, %v583
        %v585 = vadd.f32 %v581, %v584
        %vm586 = vweird.f32 %v565
        %vm587 = vweird.f32 %v581
        %vm588 = vmor %vm586, %vm587
        %v589 = vsel %vm588, %v581, %v585
        %v590 = vand.u32 2147483647, %v565
        %vm591 = vcmp.eq.f32.partialorder %v590, 8.507059e+37
        %v592 = vand.u32 %v565, 2147483648
        %v593 = vor.u32 1.1754944e-38, %v592
        %v594 = vsel %vm591, %v593, %v589
        %v595 = vmul.f32 1.0, %v594
        %v596 = vperm.slane %v580, 0
        %v597 = vperm.slane %v595, 0
        %v598 = vmul.f32 %v422, %v596
        %v599 = vmul.f32 %v442, %v597
        %600 = vst [vmem:[%s369] sm:$0xff] %v598
        %601 = vst [vmem:[%s369 + $0x8] sm:$0xff] %v599
        %s602 = sand.u32 %s231, 1
        %s603 = scalar_lea.sflag [#allocation5], %s602
        %s604 = sand.u32 %s231, 1
        %s605 = smul.addr %s604, 16
        %s606 = scalar_lea.vmem [#allocation6], %s605
        // Predicated region
        $region57: #{tpu_custom_call.1} parent=51 // pred_check
          %p607 = pneg %p241
        $region58: #{tpu_custom_call.1} parent=51 // pred_check_branch
          %609 = sbr.rel (%p607) target = $region60
        $region59: #{tpu_custom_call.1} parent=51 // pred_region
          %s610 = smul.u32 2, %s32
          %612 = vsyncadd %s603, 0
          %s613 = smul.addr %s31, 2
          %s614 = sadd.s32 %s610, %s613
          %s615 = smul.addr %s614, 8
          %s616 = scalar_lea.hbm %s8, %s615
          %s618 = sshll.u32 %s606, 4
          %s619 = int_to_ptr.vmem [resolvable:$true] %s618
          %s620 = sshll.u32 %s616, 4
          %s621 = int_to_ptr.hbm [resolvable:$true] %s620
          %623 = dma.vmem_to_hbm [thread:$0]  %s619, 256, %s621, %s603
        $region60: #{tpu_custom_call.1} parent=51 // pred_fallthru
          _
      $region52: #{tpu_custom_call.1} parent=5 // pred_fallthru
        _
      %p624 = scmp.le.s32.totalorder 2, %s22
      // Predicated region
      $region61: #{tpu_custom_call.1} parent=5 // pred_check
        %p625 = pneg %p624
      $region62: #{tpu_custom_call.1} parent=5 // pred_check_branch
        %627 = sbr.rel (%p625) target = $region64
      $region63: #{tpu_custom_call.1} parent=5 // pred_region
        %s628 = ssub.s32 %s22, 2
        // Predicated region
        $region65: #{tpu_custom_call.1} parent=63 // pred_check
          %p629 = pneg %p247
        $region66: #{tpu_custom_call.1} parent=63 // pred_check_branch
          %631 = sbr.rel (%p629) target = $region68
        $region67: #{tpu_custom_call.1} parent=63 // pred_region
          %s632 = sand.u32 %s232, 1
          %s633 = scalar_lea.sflag [#allocation5], %s632
          %s634 = sand.u32 %s232, 1
          %s635 = smul.addr %s634, 16
          %s636 = scalar_lea.vmem [#allocation6], %s635
          %638 = dma.done %s633, 256
        $region68: #{tpu_custom_call.1} parent=63 // pred_fallthru
          _
      $region64: #{tpu_custom_call.1} parent=5 // pred_fallthru
        _
    $region6: #{tpu_custom_call.1} parent=1 // loop_footer
      %s26 = sadd.s32 1, %s22
    $region7: #{tpu_custom_call.1} parent=1 // loop_footer_branch
      %21 = sbr.rel target = $region3
    $region8: #{tpu_custom_call.1} parent=1 // loop_exit
      _
    %639 = vsyncpa [#allocation4], 1
    %s640 = scalar_lea.sflag [#allocation4], 1
    %641 = vsyncpa %s640, 1
    %642 = vsyncpa [#allocation5], 1
    %s643 = scalar_lea.sflag [#allocation5], 1
    %644 = vsyncpa %s643, 1

</llo_original>
